<compile_context>
chip_gen: v7x
topology: tpu7x:2x2x1
jax: 0.10.0
libtpu: 0.0.40
codegen_flags: <defaults>
</compile_context>

<pallas_src>
import jax
import jax.numpy as jnp
from jax import lax
from jax.experimental import pallas as pl
from jax.experimental.pallas import tpu as pltpu

EPS_BN = 1e-5
EXPANSION = 4
_BF16 = jnp.bfloat16


# --------------------------- VMEM budget / tiling --------------------------- #

def _vmem_capacity_bytes():
    try:
        return int(pltpu.get_tpu_info().vmem_capacity_bytes)
    except Exception:
        return 64 * 1024 * 1024        # assume the smallest (v7x) if unknown


# Explicit scoped-VMEM limit (default is 16/32 MiB); leave headroom for the
# compiler's internal scratch and double buffering.  v5e/v6e -> 96 MiB,
# v7x (64 MiB physical) -> 48 MiB.
_VMEM_LIMIT = min((_vmem_capacity_bytes() * 3) // 4, 96 * 1024 * 1024)


def _round_up(x, m):
    return ((x + m - 1) // m) * m


def _pick_row_tile(rows, bytes_per_row, budget_bytes, min_steps=8):
    """Pick a divisor of `rows` (= N*H) for the row-tiled 1x1 stages.

    Take the *largest* tile whose double-buffered working set fits the budget
    (amortizes the ~0.35 us/step grid overhead; the 1x1 stages are mem-bound),
    subject to keeping >= min_steps grid steps for DMA pipelining, preferring
    an even step count so v7x's two TensorCores stay balanced.
    """
    divisors = [d for d in range(1, rows + 1) if rows % d == 0]
    fitting = [d for d in divisors if 2 * d * bytes_per_row <= budget_bytes]
    if not fitting:
        return divisors[0]
    enough = [d for d in fitting if rows // d >= min_steps]
    cands = enough if enough else [min(fitting)]
    even = [d for d in cands if (rows // d) % 2 == 0]
    return max(even) if even else max(cands)


def _compiler_params():
    return pltpu.CompilerParams(
        dimension_semantics=("parallel",),
        vmem_limit_bytes=int(_VMEM_LIMIT))


# ------------------------------ Pallas kernels ------------------------------ #

def _sum_and_sumsq(y):
    # Single fused pass over the conv output (f32): [sum(y); sum(y*y)] per
    # channel.  Variance is formed later as E[y^2] - E[y]^2 in f32.
    return jnp.concatenate(
        [jnp.sum(y, axis=0, keepdims=True),
         jnp.sum(y * y, axis=0, keepdims=True)], axis=0)


def _stage_a_kernel(x_ref, wcat_ref, y1_ref, s1_ref, ss_ref):
    # Fused 1x1 conv: one matmul x @ [ws | w1] (better MXU column utilization
    # than two narrow matmuls, one pass of x through the MXU).  Only y1 is
    # written back; the shortcut output contributes statistics only and is
    # recomputed in stage D (saves 2*m*c4 HBM write + read).
    tr, w, cin = x_ref.shape
    p = s1_ref.shape[2]
    c4 = ss_ref.shape[2]
    x = x_ref[...].reshape(tr * w, cin)                         # already bf16
    y = jnp.dot(x, wcat_ref[...], preferred_element_type=jnp.float32)
    sc = y[:, :c4]                                              # shortcut cols
    y1 = y[:, c4:]                                              # conv1 cols
    ss_ref[0] = _sum_and_sumsq(sc)
    s1_ref[0] = _sum_and_sumsq(y1)
    y1_ref[...] = y1.reshape(tr, w, p).astype(y1_ref.dtype)


def _stage_b_kernel(y1_ref, a1_ref, b1_ref, w2_ref, y2_ref, s2_ref, pad_ref):
    # bn1 (precomputed per-channel scale/shift) + relu, then 3x3 conv (stride 1,
    # pad 1) as 9 accumulated matmuls straight from the padded scratch -- no
    # (H*W, 9P) im2col buffer, no concat copies (saves vst slot on v5e and
    # VMEM on v7x).  Scratch width is padded to a multiple of 8 sublanes.
    _, h, w, p = y1_ref.shape
    y1 = y1_ref[0].astype(jnp.float32) * a1_ref[...] + b1_ref[...]
    y1 = jnp.maximum(y1, 0.0).astype(pad_ref.dtype)

    # Zero only the 1-pixel halo actually read (scratch persists across grid
    # steps and is otherwise stale), then write the interior once.
    zrow = jnp.zeros((1, w + 2, p), pad_ref.dtype)
    zcol = jnp.zeros((h, 1, p), pad_ref.dtype)
    pad_ref[0:1, 0:w + 2, :] = zrow
    pad_ref[h + 1:h + 2, 0:w + 2, :] = zrow
    pad_ref[1:h + 1, 0:1, :] = zcol
    pad_ref[1:h + 1, w + 1:w + 2, :] = zcol
    pad_ref[1:h + 1, 1:w + 1, :] = y1

    acc = jnp.zeros((h * w, p), jnp.float32)
    for kh in range(3):
        for kw in range(3):
            tap = pad_ref[kh:kh + h, kw:kw + w, :].reshape(h * w, p)
            acc = acc + jnp.dot(tap, w2_ref[kh * 3 + kw],
                                preferred_element_type=jnp.float32)

    s2_ref[0] = _sum_and_sumsq(acc)
    y2_ref[0] = acc.reshape(h, w, p).astype(y2_ref.dtype)


def _stage_c_kernel(y2_ref, a2_ref, b2_ref, w3_ref, y3_ref, s3_ref):
    # bn2 + relu, then conv3 (1x1), plus bn3 partial statistics.
    tr, w, p = y2_ref.shape
    c4 = w3_ref.shape[1]
    y2 = y2_ref[...].astype(jnp.float32) * a2_ref[...] + b2_ref[...]
    y2 = jnp.maximum(y2, 0.0).astype(_BF16).reshape(tr * w, p)
    y3 = jnp.dot(y2, w3_ref[...], preferred_element_type=jnp.float32)
    s3_ref[0] = _sum_and_sumsq(y3)
    y3_ref[...] = y3.reshape(tr, w, c4).astype(y3_ref.dtype)


def _stage_d_kernel(y3_ref, x_ref, ws_ref, a3_ref, b3_ref, as_ref, bs_ref,
                    o_ref):
    # Recompute the shortcut conv (MXU is idle in this mem-bound stage; x read
    # is cheaper than the stored 4P shortcut activation), apply bn3 and
    # bn_shortcut (precomputed scale/shift), residual add, final relu.
    tr, w, c4 = y3_ref.shape
    cin = x_ref.shape[2]
    x = x_ref[...].reshape(tr * w, cin)                         # bf16
    sc = jnp.dot(x, ws_ref[...],
                 preferred_element_type=jnp.float32).reshape(tr, w, c4)
    sc = sc * as_ref[...] + bs_ref[...]
    y3 = y3_ref[...].astype(jnp.float32) * a3_ref[...] + b3_ref[...]
    o_ref[...] = jnp.maximum(y3 + sc, 0.0).astype(o_ref.dtype)


# ----------------------------- BN finalize glue ----------------------------- #

def _bn_scale_shift(stats, gamma, beta, count):
    # stats: (tiles, 2, C) per-tile [sum; sum_sq] partials.  This reduction is a
    # few KB of per-channel scalars, done in plain JAX between kernels; the
    # per-element normalize+affine is fused into the next Pallas stage.
    tot = jnp.sum(stats.astype(jnp.float32), axis=0)             # (2, C)
    mean = tot[0] / count
    var = jnp.maximum(tot[1] / count - mean * mean, 0.0)         # biased, f32
    scale = gamma.reshape(-1).astype(jnp.float32) * lax.rsqrt(var + EPS_BN)
    shift = beta.reshape(-1).astype(jnp.float32) - mean * scale
    return scale.reshape(1, -1), shift.reshape(1, -1)


# ------------------------------ forward wrapper ------------------------------ #

def bottleneck_forward_nhwc(x_nhwc, params, stride=1, row_tile=None):
    # TODO(synk): stride > 1 (strided conv2 / strided shortcut) and
    # norm_type='gn' are not wired into the kernels; module defaults only.
    assert stride == 1
    n, h, w, cin = x_nhwc.shape
    p = params["w1"].shape[0]
    c4 = params["w3"].shape[0]
    rows = n * h
    m = n * h * w                                    # BN statistic count

    # Weights -> channel-last bf16 MXU operands.  Shortcut weight first in the
    # concatenation so the y1 slice starts at a lane-aligned column (c4 = 4P).
    w1 = params["w1"][:, :, 0, 0].T.astype(_BF16)                       # (Cin, P)
    ws = params["ws"][:, :, 0, 0].T.astype(_BF16)                       # (Cin, 4P)
    w3 = params["w3"][:, :, 0, 0].T.astype(_BF16)                       # (P, 4P)
    w2 = jnp.transpose(params["w2"], (2, 3, 1, 0)).reshape(9, p, p).astype(_BF16)
    wcat = jnp.concatenate([ws, w1], axis=1)                            # (Cin, 4P+P)

    # bf16 activations end-to-end: halves the dominant HBM byte streams of the
    # mem-bound 1x1 stages (operands were cast to bf16 for the MXU anyway).
    x = x_nhwc.astype(_BF16).reshape(rows, w, cin)

    if row_tile is None:
        # Per-row double-buffered footprint of the heaviest row-tiled stage
        # (A: cin+p, C: p+c4, D: cin+2*c4 bf16 bytes per pixel column).
        bytes_per_row = 2 * w * max(cin + p, p + c4, cin + 2 * c4)
        row_tile = _pick_row_tile(rows, bytes_per_row, (_VMEM_LIMIT * 2) // 3)
    assert rows % row_tile == 0, (rows, row_tile)
    nt = rows // row_tile

    # Stage B working-set check against the scoped-VMEM budget (v7x: 48 MiB).
    w_pad = _round_up(w + 2, 8)
    stage_b_bytes = (8 * h * w * p                  # 2x double-buffered bf16 io
                     + 2 * (h + 2) * w_pad * p      # padded bf16 scratch
                     + 4 * h * w * p                # f32 accumulator
                     + 4 * 9 * p * p)               # bf16 weights (2 bufs)
    if stage_b_bytes > _VMEM_LIMIT:
        # TODO(synk): H-tile stage B with a 1-row halo for very large images.
        raise ValueError(
            f"stage B working set {stage_b_bytes} B exceeds VMEM limit "
            f"{_VMEM_LIMIT} B")

    # ---- stage A: fused conv1 + shortcut conv, partial BN stats --------------
    y1p, s1, ss = pl.pallas_call(
        _stage_a_kernel,
        grid=(nt,),
        in_specs=[pl.BlockSpec((row_tile, w, cin), lambda i: (i, 0, 0)),
                  pl.BlockSpec((cin, c4 + p), lambda i: (0, 0))],
        out_specs=(pl.BlockSpec((row_tile, w, p), lambda i: (i, 0, 0)),
                   pl.BlockSpec((1, 2, p), lambda i: (i, 0, 0)),
                   pl.BlockSpec((1, 2, c4), lambda i: (i, 0, 0))),
        out_shape=(jax.ShapeDtypeStruct((rows, w, p), _BF16),
                   jax.ShapeDtypeStruct((nt, 2, p), jnp.float32),
                   jax.ShapeDtypeStruct((nt, 2, c4), jnp.float32)),
        compiler_params=_compiler_params(),
        cost_estimate=pl.CostEstimate(
            flops=2 * m * cin * (p + c4), transcendentals=0,
            bytes_accessed=2 * m * (cin + p)),
    )(x, wcat)

    a1, b1 = _bn_scale_shift(s1, params["g1"], params["b1"], m)
    a_s, b_s = _bn_scale_shift(ss, params["gs"], params["bs"], m)

    # ---- stage B: bn1+relu, 3x3 conv as 9 accumulated matmuls ----------------
    y1_img = y1p.reshape(n, h, w, p)
    y2p, s2 = pl.pallas_call(
        _stage_b_kernel,
        grid=(n,),
        in_specs=[pl.BlockSpec((1, h, w, p), lambda i: (i, 0, 0, 0)),
                  pl.BlockSpec((1, p), lambda i: (0, 0)),
                  pl.BlockSpec((1, p), lambda i: (0, 0)),
                  pl.BlockSpec((9, p, p), lambda i: (0, 0, 0))],
        out_specs=(pl.BlockSpec((1, h, w, p), lambda i: (i, 0, 0, 0)),
                   pl.BlockSpec((1, 2, p), lambda i: (i, 0, 0))),
        out_shape=(jax.ShapeDtypeStruct((n, h, w, p), _BF16),
                   jax.ShapeDtypeStruct((n, 2, p), jnp.float32)),
        scratch_shapes=[pltpu.VMEM((h + 2, w_pad, p), _BF16)],
        compiler_params=_compiler_params(),
        cost_estimate=pl.CostEstimate(
            flops=2 * m * (9 * p) * p, transcendentals=0,
            bytes_accessed=4 * m * p),
    )(y1_img, a1, b1, w2)

    a2, b2 = _bn_scale_shift(s2, params["g2"], params["b2"], m)

    # ---- stage C: bn2+relu, conv3, partial BN stats ---------------------------
    y2_rows = y2p.reshape(rows, w, p)
    y3p, s3 = pl.pallas_call(
        _stage_c_kernel,
        grid=(nt,),
        in_specs=[pl.BlockSpec((row_tile, w, p), lambda i: (i, 0, 0)),
                  pl.BlockSpec((1, p), lambda i: (0, 0)),
                  pl.BlockSpec((1, p), lambda i: (0, 0)),
                  pl.BlockSpec((p, c4), lambda i: (0, 0))],
        out_specs=(pl.BlockSpec((row_tile, w, c4), lambda i: (i, 0, 0)),
                   pl.BlockSpec((1, 2, c4), lambda i: (i, 0, 0))),
        out_shape=(jax.ShapeDtypeStruct((rows, w, c4), _BF16),
                   jax.ShapeDtypeStruct((nt, 2, c4), jnp.float32)),
        compiler_params=_compiler_params(),
        cost_estimate=pl.CostEstimate(
            flops=2 * m * p * c4, transcendentals=0,
            bytes_accessed=2 * m * (p + c4)),
    )(y2_rows, a2, b2, w3)

    a3, b3 = _bn_scale_shift(s3, params["g3"], params["b3"], m)

    # ---- stage D: shortcut recompute + bn3 + bn_sc + residual add + relu ------
    out = pl.pallas_call(
        _stage_d_kernel,
        grid=(nt,),
        in_specs=[pl.BlockSpec((row_tile, w, c4), lambda i: (i, 0, 0)),
                  pl.BlockSpec((row_tile, w, cin), lambda i: (i, 0, 0)),
                  pl.BlockSpec((cin, c4), lambda i: (0, 0)),
                  pl.BlockSpec((1, c4), lambda i: (0, 0)),
                  pl.BlockSpec((1, c4), lambda i: (0, 0)),
                  pl.BlockSpec((1, c4), lambda i: (0, 0)),
                  pl.BlockSpec((1, c4), lambda i: (0, 0))],
        out_specs=pl.BlockSpec((row_tile, w, c4), lambda i: (i, 0, 0)),
        out_shape=jax.ShapeDtypeStruct((rows, w, c4), _BF16),
        compiler_params=_compiler_params(),
        cost_estimate=pl.CostEstimate(
            flops=2 * m * cin * c4 + 4 * m * c4, transcendentals=0,
            bytes_accessed=2 * m * (cin + 2 * c4)),
    )(y3p, x, ws, a3, b3, a_s, b_s)

    return out.reshape(n, h, w, c4)


def bottleneck_forward(x_nchw, params, stride=1, row_tile=None):
    # NCHW in / NCHW out to match the PyTorch module.  A real network should
    # stay NHWC (and bf16) end-to-end; these transposes/casts are harness glue.
    x = jnp.transpose(x_nchw, (0, 2, 3, 1))
    out = bottleneck_forward_nhwc(x, params, stride=stride, row_tile=row_tile)
    return jnp.transpose(out, (0, 3, 1, 2)).astype(jnp.float32)


# ------------------------------ params / reference -------------------------- #

def standardize_conv_weight(w):
    # Conv2d_WN weight standardization (matches the PyTorch reference).
    mean = jnp.mean(w, axis=(1, 2, 3), keepdims=True)
    w = w - mean
    std = jnp.std(w.reshape(w.shape[0], -1), axis=1, ddof=1).reshape(-1, 1, 1, 1)
    return w / (std + 1e-5)


def init_bottleneck_params(key, in_planes, planes, conv_type="original"):
    ks = jax.random.split(key, 12)

    def conv_w(k, co, ci, kh, kw):
        w = 0.1 * jax.random.normal(k, (co, ci, kh, kw), jnp.float32)
        return standardize_conv_weight(w) if conv_type == "ws" else w

    def bn_p(kg, kb, c):
        g = 1.0 + 0.1 * jax.random.normal(kg, (1, c), jnp.float32)
        b = 0.1 * jax.random.normal(kb, (1, c), jnp.float32)
        return g, b

    cout = EXPANSION * planes
    w1 = conv_w(ks[0], planes, in_planes, 1, 1)
    w2 = conv_w(ks[1], planes, planes, 3, 3)
    w3 = conv_w(ks[2], cout, planes, 1, 1)
    ws = conv_w(ks[3], cout, in_planes, 1, 1)
    g1, b1 = bn_p(ks[4], ks[5], planes)
    g2, b2 = bn_p(ks[6], ks[7], planes)
    g3, b3 = bn_p(ks[8], ks[9], cout)
    gs, bs = bn_p(ks[10], ks[11], cout)
    return dict(w1=w1, w2=w2, w3=w3, ws=ws, g1=g1, b1=b1, g2=g2, b2=b2,
                g3=g3, b3=b3, gs=gs, bs=bs)


def bottleneck_reference(x, p):
    # Pure-JAX f32 reference (train-mode BN with biased batch statistics).
    def conv(x, w, padding="VALID"):
        return lax.conv_general_dilated(
            x, w, (1, 1), padding, dimension_numbers=("NCHW", "OIHW", "NCHW"))

    def bn(y, g, b):
        mu = jnp.mean(y, axis=(0, 2, 3), keepdims=True)
        var = jnp.mean((y - mu) ** 2, axis=(0, 2, 3), keepdims=True)
        return ((y - mu) * lax.rsqrt(var + EPS_BN)
                * g.reshape(1, -1, 1, 1) + b.reshape(1, -1, 1, 1))

    out = jax.nn.relu(bn(conv(x, p["w1"]), p["g1"], p["b1"]))
    out = jax.nn.relu(bn(conv(out, p["w2"], ((1, 1), (1, 1))), p["g2"], p["b2"]))
    out = bn(conv(out, p["w3"]), p["g3"], p["b3"])
    short = bn(conv(x, p["ws"]), p["gs"], p["bs"])
    return jax.nn.relu(out + short)


if __name__ == "__main__":
    key = jax.random.PRNGKey(0)
    kx, kp = jax.random.split(key)

    N, Cin, H, W = 2, 16, 16, 16
    planes = 8              # expansion*planes = 32 != Cin -> projection shortcut
    x = jax.random.normal(kx, (N, Cin, H, W), jnp.float32)
    params = init_bottleneck_params(kp, Cin, planes, conv_type="original")

    # row_tile=8 forces a multi-step grid so the cross-tile (two-phase) BN
    # reduction path is exercised even at this tiny demo size.
    out = jax.block_until_ready(
        bottleneck_forward(x, params, stride=1, row_tile=8))
    assert out.shape == (N, EXPANSION * planes, H, W), out.shape

    ref = bottleneck_reference(x, params)
    err = float(jnp.max(jnp.abs(out - ref)))
    tol = 3e-2 * max(1.0, float(jnp.max(jnp.abs(ref))))   # bf16 matmul pipeline
    if err <= tol:
        print("KERNEL_OK")
    else:
        print(f"mismatch: max abs err = {err} (tol {tol})")
</pallas_src>

<mosaic_0001>
module attributes {stable_mosaic.version = 11 : i64} {
  func.func @_stage_a_kernel(%arg0: i32, %arg1: memref<8x16x16xbf16, #tpu.memory_space<vmem>>, %arg2: memref<16x40xbf16, #tpu.memory_space<vmem>>, %arg3: memref<8x16x8xbf16, #tpu.memory_space<vmem>>, %arg4: memref<1x2x8xf32, #tpu.memory_space<vmem>>, %arg5: memref<1x2x32xf32, #tpu.memory_space<vmem>>) attributes {dimension_semantics = [#tpu.dimension_semantics<parallel>], iteration_bounds = array<i64: 4>, scalar_prefetch = 0 : i64, scratch_operands = 0 : i64, tpu.core_type = #tpu.core_type<tc>, window_params = [{transform_indices = @transform_0, window_bounds = array<i64: 8, 16, 16>}, {pipeline_mode = #tpu.pipeline_mode<synchronous>, transform_indices = @transform_1, window_bounds = array<i64: 16, 40>}, {transform_indices = @transform_2, window_bounds = array<i64: 8, 16, 8>}, {transform_indices = @transform_3, window_bounds = array<i64: 1, 2, 8>}, {transform_indices = @transform_4, window_bounds = array<i64: 1, 2, 32>}]} {
    %c0 = arith.constant 0 : index
    %c0_0 = arith.constant 0 : index
    %c0_1 = arith.constant 0 : index
    %0 = vector.load %arg1[%c0, %c0_0, %c0_1] : memref<8x16x16xbf16, #tpu.memory_space<vmem>>, vector<8x16x16xbf16>
    %1 = vector.shape_cast %0 : vector<8x16x16xbf16> to vector<128x16xbf16>
    %c0_2 = arith.constant 0 : index
    %c0_3 = arith.constant 0 : index
    %2 = vector.load %arg2[%c0_2, %c0_3] : memref<16x40xbf16, #tpu.memory_space<vmem>>, vector<16x40xbf16>
    %cst = arith.constant dense<0.000000e+00> : vector<128x40xf32>
    %3 = tpu.matmul %1, %2, %cst {dimension_numbers = #tpu.dot_dimension_numbers<[1], [0], [0], [1], [0, 0, 1, 1], [], []>} : vector<128x16xbf16>, vector<16x40xbf16>, vector<128x40xf32> -> vector<128x40xf32>
    %4 = vector.extract_strided_slice %3 {offsets = [0, 0], sizes = [128, 32], strides = [1, 1]} : vector<128x40xf32> to vector<128x32xf32>
    %5 = vector.extract_strided_slice %3 {offsets = [0, 32], sizes = [128, 8], strides = [1, 1]} : vector<128x40xf32> to vector<128x8xf32>
    %cst_4 = arith.constant dense<0.000000e+00> : vector<32xf32>
    %6 = vector.multi_reduction <add>, %4, %cst_4 [0] : vector<128x32xf32> to vector<32xf32>
    %7 = vector.shape_cast %6 : vector<32xf32> to vector<1x32xf32>
    %8 = arith.mulf %4, %4 : vector<128x32xf32>
    %cst_5 = arith.constant dense<0.000000e+00> : vector<32xf32>
    %9 = vector.multi_reduction <add>, %8, %cst_5 [0] : vector<128x32xf32> to vector<32xf32>
    %10 = vector.shape_cast %9 : vector<32xf32> to vector<1x32xf32>
    %11 = tpu.concatenate %7, %10 in 0 : vector<1x32xf32>, vector<1x32xf32> -> vector<2x32xf32>
    %c0_6 = arith.constant 0 : index
    %c0_7 = arith.constant 0 : index
    %c0_8 = arith.constant 0 : index
    %12 = vector.load %arg5[%c0_6, %c0_7, %c0_8] : memref<1x2x32xf32, #tpu.memory_space<vmem>>, vector<1x2x32xf32>
    %13 = vector.shape_cast %12 : vector<1x2x32xf32> to vector<2x32xf32>
    %14 = vector.shape_cast %11 : vector<2x32xf32> to vector<1x2x32xf32>
    tpu.vector_store %arg5[%c0_6, %c0_7, %c0_8], %14 {strides = array<i32>} : memref<1x2x32xf32, #tpu.memory_space<vmem>>, vector<1x2x32xf32>,
    %cst_9 = arith.constant dense<0.000000e+00> : vector<8xf32>
    %15 = vector.multi_reduction <add>, %5, %cst_9 [0] : vector<128x8xf32> to vector<8xf32>
    %16 = vector.shape_cast %15 : vector<8xf32> to vector<1x8xf32>
    %17 = arith.mulf %5, %5 : vector<128x8xf32>
    %cst_10 = arith.constant dense<0.000000e+00> : vector<8xf32>
    %18 = vector.multi_reduction <add>, %17, %cst_10 [0] : vector<128x8xf32> to vector<8xf32>
    %19 = vector.shape_cast %18 : vector<8xf32> to vector<1x8xf32>
    %20 = tpu.concatenate %16, %19 in 0 : vector<1x8xf32>, vector<1x8xf32> -> vector<2x8xf32>
    %c0_11 = arith.constant 0 : index
    %c0_12 = arith.constant 0 : index
    %c0_13 = arith.constant 0 : index
    %21 = vector.load %arg4[%c0_11, %c0_12, %c0_13] : memref<1x2x8xf32, #tpu.memory_space<vmem>>, vector<1x2x8xf32>
    %22 = vector.shape_cast %21 : vector<1x2x8xf32> to vector<2x8xf32>
    %23 = vector.shape_cast %20 : vector<2x8xf32> to vector<1x2x8xf32>
    tpu.vector_store %arg4[%c0_11, %c0_12, %c0_13], %23 {strides = array<i32>} : memref<1x2x8xf32, #tpu.memory_space<vmem>>, vector<1x2x8xf32>,
    %24 = vector.shape_cast %5 : vector<128x8xf32> to vector<8x16x8xf32>
    %25 = arith.truncf %24 : vector<8x16x8xf32> to vector<8x16x8xbf16>
    %c0_14 = arith.constant 0 : index
    %c0_15 = arith.constant 0 : index
    %c0_16 = arith.constant 0 : index
    %26 = vector.load %arg3[%c0_14, %c0_15, %c0_16] : memref<8x16x8xbf16, #tpu.memory_space<vmem>>, vector<8x16x8xbf16>
    tpu.vector_store %arg3[%c0_14, %c0_15, %c0_16], %25 {strides = array<i32>} : memref<8x16x8xbf16, #tpu.memory_space<vmem>>, vector<8x16x8xbf16>,
    return
  }
  func.func @transform_0(%arg0: i32) -> (i32, i32, i32) {
    %c0_i32 = arith.constant 0 : i32
    %c0_i32_0 = arith.constant 0 : i32
    %c0_i32_1 = arith.constant 0 : i32
    return %arg0, %c0_i32, %c0_i32_0 : i32, i32, i32
  }
  func.func @transform_1(%arg0: i32) -> (i32, i32) {
    %c0_i32 = arith.constant 0 : i32
    %c0_i32_0 = arith.constant 0 : i32
    %c0_i32_1 = arith.constant 0 : i32
    return %c0_i32, %c0_i32_0 : i32, i32
  }
  func.func @transform_2(%arg0: i32) -> (i32, i32, i32) {
    %c0_i32 = arith.constant 0 : i32
    %c0_i32_0 = arith.constant 0 : i32
    %c0_i32_1 = arith.constant 0 : i32
    return %arg0, %c0_i32, %c0_i32_0 : i32, i32, i32
  }
  func.func @transform_3(%arg0: i32) -> (i32, i32, i32) {
    %c0_i32 = arith.constant 0 : i32
    %c0_i32_0 = arith.constant 0 : i32
    %c0_i32_1 = arith.constant 0 : i32
    return %arg0, %c0_i32, %c0_i32_0 : i32, i32, i32
  }
  func.func @transform_4(%arg0: i32) -> (i32, i32, i32) {
    %c0_i32 = arith.constant 0 : i32
    %c0_i32_0 = arith.constant 0 : i32
    %c0_i32_1 = arith.constant 0 : i32
    return %arg0, %c0_i32, %c0_i32_0 : i32, i32, i32
  }
}

</mosaic_0001>

<llo_original>
// kernel: tpu_custom_call.1
$region0: #{tpu_custom_call.1}
  #allocation0 [shape = 'u32[]', space=smem, size = 0x4, offset = 0x4, fixed_abs, tag = 'smem constant byte address 0x4 - core index']
  #allocation1 [shape = 'u32[144,128]{1,0:T(1,128)}', space=vmem, size = 0x12000, scoped, tag = 'internal scratch']
  %s0 = inlined_call_operand.vmem [shape: bf16[32,16,16], index: 0, kind: input, shape index: {}]
  %s1 = inlined_call_operand.vmem [shape: bf16[16,40], index: 1, kind: input, shape index: {}]
  %s2 = inlined_call_operand.vmem [shape: bf16[32,16,8], index: 2, kind: output, shape index: {0}]
  %s3 = inlined_call_operand.hbm [shape: f32[4,2,8], index: 3, kind: output, shape index: {1}]
  %s4 = inlined_call_operand.hbm [shape: f32[4,2,32], index: 4, kind: output, shape index: {2}]
  %5 = xla_tuple %s2, %s3, %s4
  %s6 = sld [smem:[#allocation0]]
  $region57: #{tpu_custom_call.1} parent=0
    _
  %s8 = ssub.s32 1, %s6
  %s9 = scalar_select 0, %s8, %s6
  $region1: #{tpu_custom_call.1} parent=0
    #allocation2 [shape = 'u8[2048]{0}', space=vmem, size = 0x800, scoped, tag = 'output window, operand 1']
    #allocation3 [shape = 's32[2]{0}', space=sflag, size = 0x8, scoped, tag = 'scoped memory for tpu_custom_call.1']
    #allocation4 [shape = 'u8[2048]{0}', space=vmem, size = 0x800, scoped, tag = 'output window, operand 2']
    #allocation5 [shape = 's32[2]{0}', space=sflag, size = 0x8, scoped, tag = 'scoped memory for tpu_custom_call.1']
    %10 = vsyncpa [#allocation3], 0
    %s11 = scalar_lea.sflag [#allocation3], 1
    %12 = vsyncpa %s11, 0
    %13 = vsyncpa [#allocation5], 0
    %s14 = scalar_lea.sflag [#allocation5], 1
    %15 = vsyncpa %s14, 0
    loop: start=0, step=1, limit=6
    $region2: #{tpu_custom_call.1} parent=1 // loop_pre_header
      _
    $region3: #{tpu_custom_call.1} parent=1 // loop_header
      %s17 = sphi 0, %s21
      %p18 = scmp.ge.s32.totalorder %s17, 6
      %s27 = sphi 0, %s29
      %s30 = sphi 0, %s27
      %s31 = sphi 0, %s30
      %s47 = sphi 0, %s31
      %s51 = sphi 0, %s51
      %s53 = sphi 0, %s51
      %s54 = sphi 0, %s53
      %s68 = sphi 0, %s54
      %s74 = sphi 0, %s76
      %s77 = sphi 0, %s74
      %s78 = sphi 0, %s77
      %s94 = sphi 0, %s78
      %s100 = sphi 0, %s102
      %s103 = sphi 0, %s100
      %s104 = sphi 0, %s103
      %s120 = sphi 0, %s104
      %s126 = sphi 0, %s128
      %s129 = sphi 0, %s126
      %s130 = sphi 0, %s129
      %s146 = sphi 0, %s130
    $region4: #{tpu_custom_call.1} parent=1 // loop_header_branch
      %20 = sbr.rel (%p18) target = $region8
    $region5: #{tpu_custom_call.1} parent=1 // loop_body
      %s22 = ssub.s32 %s17, 1
      %s23 = ssub.s32 %s17, 2
      %s24 = sadd.s32 %s17, 1
      %s25 = ssub.s32 %s17, %s24
      %p26 = scmp.eq.s32.totalorder %s25, 0
      %s28 = sadd.s32 %s27, 1
      %s29 = scalar_select %p26, %s27, %s28
      %p32 = pneg %p26
      %p33 = scmp.eq.s32.totalorder %s17, 3
      %p34 = por %p32, %p33
      %p35 = scmp.ne.s32.totalorder %s27, %s30
      %p36 = scmp.eq.s32.totalorder %s17, 0
      %p37 = por %p35, %p36
      %p38 = scmp.ne.s32.totalorder %s27, %s30
      %p39 = scmp.eq.s32.totalorder %s22, 3
      %p40 = por %p38, %p39
      %p41 = scmp.ne.s32.totalorder %s30, %s31
      %p42 = scmp.eq.s32.totalorder %s22, 0
      %p43 = por %p41, %p42
      %p44 = scmp.ne.s32.totalorder %s30, %s31
      %p45 = scmp.eq.s32.totalorder %s23, 3
      %p46 = por %p44, %p45
      %p48 = scmp.ne.s32.totalorder %s31, %s47
      %p49 = scmp.eq.s32.totalorder %s23, 0
      %p50 = por %p48, %p49
      %s52 = sadd.s32 %s51, 1
      %p55 = scmp.eq.s32.totalorder %s17, 3
      %p56 = scmp.ne.s32.totalorder %s51, %s53
      %p57 = scmp.eq.s32.totalorder %s17, 0
      %p58 = por %p56, %p57
      %p59 = scmp.ne.s32.totalorder %s51, %s53
      %p60 = scmp.eq.s32.totalorder %s22, 3
      %p61 = por %p59, %p60
      %p62 = scmp.ne.s32.totalorder %s53, %s54
      %p63 = scmp.eq.s32.totalorder %s22, 0
      %p64 = por %p62, %p63
      %p65 = scmp.ne.s32.totalorder %s53, %s54
      %p66 = scmp.eq.s32.totalorder %s23, 3
      %p67 = por %p65, %p66
      %p69 = scmp.ne.s32.totalorder %s54, %s68
      %p70 = scmp.eq.s32.totalorder %s23, 0
      %p71 = por %p69, %p70
      %s72 = ssub.s32 %s17, %s24
      %p73 = scmp.eq.s32.totalorder %s72, 0
      %s75 = sadd.s32 %s74, 1
      %s76 = scalar_select %p73, %s74, %s75
      %p79 = pneg %p73
      %p80 = scmp.eq.s32.totalorder %s17, 3
      %p81 = por %p79, %p80
      %p82 = scmp.ne.s32.totalorder %s74, %s77
      %p83 = scmp.eq.s32.totalorder %s17, 0
      %p84 = por %p82, %p83
      %p85 = scmp.ne.s32.totalorder %s74, %s77
      %p86 = scmp.eq.s32.totalorder %s22, 3
      %p87 = por %p85, %p86
      %p88 = scmp.ne.s32.totalorder %s77, %s78
      %p89 = scmp.eq.s32.totalorder %s22, 0
      %p90 = por %p88, %p89
      %p91 = scmp.ne.s32.totalorder %s77, %s78
      %p92 = scmp.eq.s32.totalorder %s23, 3
      %p93 = por %p91, %p92
      %p95 = scmp.ne.s32.totalorder %s78, %s94
      %p96 = scmp.eq.s32.totalorder %s23, 0
      %p97 = por %p95, %p96
      %s98 = ssub.s32 %s17, %s24
      %p99 = scmp.eq.s32.totalorder %s98, 0
      %s101 = sadd.s32 %s100, 1
      %s102 = scalar_select %p99, %s100, %s101
      %p105 = pneg %p99
      %p106 = scmp.eq.s32.totalorder %s17, 3
      %p107 = por %p105, %p106
      %p108 = scmp.ne.s32.totalorder %s100, %s103
      %p109 = scmp.eq.s32.totalorder %s17, 0
      %p110 = por %p108, %p109
      %p111 = scmp.ne.s32.totalorder %s100, %s103
      %p112 = scmp.eq.s32.totalorder %s22, 3
      %p113 = por %p111, %p112
      %p114 = scmp.ne.s32.totalorder %s103, %s104
      %p115 = scmp.eq.s32.totalorder %s22, 0
      %p116 = por %p114, %p115
      %p117 = scmp.ne.s32.totalorder %s103, %s104
      %p118 = scmp.eq.s32.totalorder %s23, 3
      %p119 = por %p117, %p118
      %p121 = scmp.ne.s32.totalorder %s104, %s120
      %p122 = scmp.eq.s32.totalorder %s23, 0
      %p123 = por %p121, %p122
      %s124 = ssub.s32 %s17, %s24
      %p125 = scmp.eq.s32.totalorder %s124, 0
      %s127 = sadd.s32 %s126, 1
      %s128 = scalar_select %p125, %s126, %s127
      %p131 = pneg %p125
      %p132 = scmp.eq.s32.totalorder %s17, 3
      %p133 = por %p131, %p132
      %p134 = scmp.ne.s32.totalorder %s126, %s129
      %p135 = scmp.eq.s32.totalorder %s17, 0
      %p136 = por %p134, %p135
      %p137 = scmp.ne.s32.totalorder %s126, %s129
      %p138 = scmp.eq.s32.totalorder %s22, 3
      %p139 = por %p137, %p138
      %p140 = scmp.ne.s32.totalorder %s129, %s130
      %p141 = scmp.eq.s32.totalorder %s22, 0
      %p142 = por %p140, %p141
      %p143 = scmp.ne.s32.totalorder %s129, %s130
      %p144 = scmp.eq.s32.totalorder %s23, 3
      %p145 = por %p143, %p144
      %p147 = scmp.ne.s32.totalorder %s130, %s146
      %p148 = scmp.eq.s32.totalorder %s23, 0
      %p149 = por %p147, %p148
      %p150 = scmp.le.s32.totalorder 1, %s17
      %p151 = scmp.lt.s32.totalorder %s17, 5
      %p152 = pnand %p150, %p151
      %p153 = pneg %p152
      // Predicated region
      $region9: #{tpu_custom_call.1} parent=5 // pred_check
        _
      $region10: #{tpu_custom_call.1} parent=5 // pred_check_branch
        %155 = sbr.rel (%p152) target = $region12
      $region11: #{tpu_custom_call.1} parent=5 // pred_region
        %s156 = ssub.s32 %s17, 1
        // Predicated region
        $region13: #{tpu_custom_call.1} parent=11 // pred_check
          %p157 = pneg %p64
        $region14: #{tpu_custom_call.1} parent=11 // pred_check_branch
          %159 = sbr.rel (%p157) target = $region16
        $region15: #{tpu_custom_call.1} parent=11 // pred_region
          _
        $region16: #{tpu_custom_call.1} parent=11 // pred_fallthru
          _
      $region12: #{tpu_custom_call.1} parent=5 // pred_fallthru
        _
      %p160 = scmp.lt.s32.totalorder %s17, 4
      // Predicated region
      $region17: #{tpu_custom_call.1} parent=5 // pred_check
        %p161 = pneg %p160
      $region18: #{tpu_custom_call.1} parent=5 // pred_check_branch
        %163 = sbr.rel (%p161) target = $region20
      $region19: #{tpu_custom_call.1} parent=5 // pred_region
        // Predicated region
        $region21: #{tpu_custom_call.1} parent=19 // pred_check
          %p164 = pneg %p37
        $region22: #{tpu_custom_call.1} parent=19 // pred_check_branch
          %166 = sbr.rel (%p164) target = $region24
        $region23: #{tpu_custom_call.1} parent=19 // pred_region
          %s167 = smul.u32 8, %s17
          %p168 = scmp.lt.s32.totalorder %s167, 31
          %s169 = scalar_select %p168, %s167, 31
          %s170 = smul.addr %s169, 2
          %s171 = smul.addr %s170, 4
          %s172 = scalar_lea.vmem %s0, %s171
          %s173 = smul.u32 8, %s17
        $region24: #{tpu_custom_call.1} parent=19 // pred_fallthru
          _
      $region20: #{tpu_custom_call.1} parent=5 // pred_fallthru
        _
      %p174 = scmp.le.s32.totalorder 1, %s17
      %p175 = scmp.lt.s32.totalorder %s17, 5
      %p176 = pnand %p174, %p175
      %p177 = pneg %p176
      // Predicated region
      $region25: #{tpu_custom_call.1} parent=5 // pred_check
        _
      $region26: #{tpu_custom_call.1} parent=5 // pred_check_branch
        %179 = sbr.rel (%p176) target = $region28
      $region27: #{tpu_custom_call.1} parent=5 // pred_region
        %s180 = ssub.s32 %s17, 1
        %s181 = smul.u32 8, %s22
        %p182 = scmp.lt.s32.totalorder %s181, 31
        %s183 = scalar_select %p182, %s181, 31
        %s184 = smul.addr %s183, 2
        %s185 = smul.addr %s184, 4
        %s186 = scalar_lea.vmem %s0, %s185
        %p187 = pneg %p43
        %p188 = pneg %p40
        %p189 = pneg %p64
        %p190 = pneg %p61
        %p191 = pneg %p90
        %p192 = pneg %p87
        %s193 = smul.u32 8, %s22
        %p194 = scmp.lt.s32.totalorder %s193, 31
        %s195 = scalar_select %p194, %s193, 31
        %s196 = smul.addr %s195, 2
        %s197 = smul.addr %s196, 4
        %s198 = scalar_lea.vmem %s2, %s197
        %p199 = pneg %p116
        %p200 = pneg %p113
        %s201 = sand.u32 %s103, 1
        %s202 = scalar_lea.sflag [#allocation3], %s201
        %s203 = sand.u32 %s103, 1
        %s204 = smul.addr %s203, 2
        %s205 = scalar_lea.vmem [#allocation2], %s204
        %p206 = pneg %p142
        %p207 = pneg %p139
        %s208 = sand.u32 %s129, 1
        %s209 = scalar_lea.sflag [#allocation5], %s208
        %s210 = sand.u32 %s129, 1
        %s211 = smul.addr %s210, 2
        %s212 = scalar_lea.vmem [#allocation4], %s211
        %s213 = smul.u32 8, %s22
        %p214 = scmp.lt.s32.totalorder %s213, 31
        %s215 = scalar_select %p214, %s213, 31
        %s216 = smul.addr %s215, 2
        %s217 = smul.addr %s216, 4
        %s218 = scalar_lea.vmem %s0, %s217
        %s219 = smul.u32 8, %s22
        %s220 = smul.u32 8, %s22
        %p221 = scmp.lt.s32.totalorder %s220, 31
        %s222 = scalar_select %p221, %s220, 31
        %s223 = smul.addr %s222, 2
        %s224 = smul.addr %s223, 4
        %s225 = scalar_lea.vmem %s2, %s224
        %s226 = smul.u32 8, %s22
        %v228 = vld [vmem:[%s218] sm:$0xf]
        %v229 = vld [vmem:[%s218 + $0x4] sm:$0xf]
        %v230 = vld [vmem:[%s218 + $0x8] sm:$0xf]
        %v231 = vld [vmem:[%s218 + $0xc] sm:$0xf]
        %v232 = vld [vmem:[%s218 + $0x10] sm:$0xf]
        %v233 = vld [vmem:[%s218 + $0x14] sm:$0xf]
        %v234 = vld [vmem:[%s218 + $0x18] sm:$0xf]
        %v235 = vld [vmem:[%s218 + $0x1c] sm:$0xf]
        %v236 = vld [vmem:[%s218 + $0x20] sm:$0xf]
        %v237 = vld [vmem:[%s218 + $0x24] sm:$0xf]
        %v238 = vld [vmem:[%s218 + $0x28] sm:$0xf]
        %v239 = vld [vmem:[%s218 + $0x2c] sm:$0xf]
        %v240 = vld [vmem:[%s218 + $0x30] sm:$0xf]
        %v241 = vld [vmem:[%s218 + $0x34] sm:$0xf]
        %v242 = vld [vmem:[%s218 + $0x38] sm:$0xf]
        %v243 = vld [vmem:[%s218 + $0x3c] sm:$0xf]
        %v244 = vld [vmem:[%s1] sm:$0xf]
        %v245 = vld [vmem:[%s1 + $0x4] sm:$0xf]
        %v262 = vunpack.c.l.b16 %v228
        %v263 = vunpack.c.l.b16 %v229
        %v264 = vunpack.c.l.b16 %v230
        %v265 = vunpack.c.l.b16 %v231
        %v266 = vunpack.c.l.b16 %v232
        %v267 = vunpack.c.l.b16 %v233
        %v268 = vunpack.c.l.b16 %v234
        %v269 = vunpack.c.l.b16 %v235
        %v270 = vunpack.c.l.b16 %v236
        %v271 = vunpack.c.l.b16 %v237
        %v272 = vunpack.c.l.b16 %v238
        %v273 = vunpack.c.l.b16 %v239
        %v274 = vunpack.c.l.b16 %v240
        %v275 = vunpack.c.l.b16 %v241
        %v276 = vunpack.c.l.b16 %v242
        %v277 = vunpack.c.l.b16 %v243
        %v278 = vpack.c.b16 %v263, %v262
        %v279 = vpack.c.b16 %v265, %v264
        %v280 = vpack.c.b16 %v267, %v266
        %v281 = vpack.c.b16 %v269, %v268
        %v282 = vpack.c.b16 %v271, %v270
        %v283 = vpack.c.b16 %v273, %v272
        %v284 = vpack.c.b16 %v275, %v274
        %v285 = vpack.c.b16 %v277, %v276
        %v288 = vunpack.c.l.b16 %v244
        %v289 = vunpack.c.l.b16 %v245
        %v290 = vpack.c.b16 %v289, %v288
        %vm292 = vcmask 130048
        %v294 = vsel %vm292, %v278, 0
        %v297 = vsel %vm292, %v279, 0
        %v300 = vsel %vm292, %v280, 0
        %v303 = vsel %vm292, %v281, 0
        %v306 = vsel %vm292, %v282, 0
        %v309 = vsel %vm292, %v283, 0
        %v312 = vsel %vm292, %v284, 0
        %v315 = vsel %vm292, %v285, 0
        %317 = vmatprep.subr.bf16.mxu0 0
        %318 = vmatpush1.bf16.msra.mxu0 %v290
        %319 = vmatprep.subr.bf16.mxu0 0
        %320 = vmatpush1.bf16.msra.mxu0 0
        %321 = vmatprep.subr.bf16.mxu0 0
        %322 = vmatpush1.bf16.msra.mxu0 0
        %323 = vmatprep.subr.bf16.mxu0 0
        %324 = vmatpush1.bf16.msra.mxu0 0
        %325 = vmatprep.subr.bf16.mxu0 0
        %326 = vmatpush1.bf16.msra.mxu0 0
        %327 = vmatprep.subr.bf16.mxu0 0
        %328 = vmatpush1.bf16.msra.mxu0 0
        %329 = vmatprep.subr.bf16.mxu0 0
        %330 = vmatpush1.bf16.msra.mxu0 0
        %331 = vmatprep.subr.bf16.mxu0 0
        %332 = vmatpush1.bf16.msra.mxu0 0
        %333 = vmatprep.subr.bf16.mxu0 0
        %334 = vmatpush1.bf16.msra.mxu0 0
        %335 = vmatprep.subr.bf16.mxu0 0
        %336 = vmatpush1.bf16.msra.mxu0 0
        %337 = vmatprep.subr.bf16.mxu0 0
        %338 = vmatpush1.bf16.msra.mxu0 0
        %339 = vmatprep.subr.bf16.mxu0 0
        %340 = vmatpush1.bf16.msra.mxu0 0
        %341 = vmatprep.subr.bf16.mxu0 0
        %342 = vmatpush1.bf16.msra.mxu0 0
        %343 = vmatprep.subr.bf16.mxu0 0
        %344 = vmatpush1.bf16.msra.mxu0 0
        %345 = vmatprep.subr.bf16.mxu0 0
        %346 = vmatpush1.bf16.msra.mxu0 0
        %347 = vmatprep.subr.bf16.mxu0 0
        %348 = vmatpush1.bf16.msra.mxu0 0
        %349 = vmatprep.mubr.bf16.mxu0 0
        %350 = vmatmul.mubr.bf16.gmra.mrb[0].mxu0 %v294
        %v351 = vpop.f32.mrb[0].mxu0
        %v352 = vadd.f32 0.0, %v351
        %v353 = vpop.f32.mrb[0].mxu0
        %v354 = vpop.f32.mrb[0].mxu0
        %v355 = vadd.f32 0.0, %v354
        %v356 = vpop.f32.mrb[0].mxu0
        %357 = vmatprep.mubr.bf16.mxu0 0
        %358 = vmatmul.mubr.bf16.gmra.mrb[0].mxu0 %v297
        %v359 = vpop.f32.mrb[0].mxu0
        %v360 = vadd.f32 0.0, %v359
        %v361 = vpop.f32.mrb[0].mxu0
        %v362 = vpop.f32.mrb[0].mxu0
        %v363 = vadd.f32 0.0, %v362
        %v364 = vpop.f32.mrb[0].mxu0
        %365 = vmatprep.mubr.bf16.mxu0 0
        %366 = vmatmul.mubr.bf16.gmra.mrb[0].mxu0 %v300
        %v367 = vpop.f32.mrb[0].mxu0
        %v368 = vadd.f32 0.0, %v367
        %v369 = vpop.f32.mrb[0].mxu0
        %v370 = vpop.f32.mrb[0].mxu0
        %v371 = vadd.f32 0.0, %v370
        %v372 = vpop.f32.mrb[0].mxu0
        %373 = vmatprep.mubr.bf16.mxu0 0
        %374 = vmatmul.mubr.bf16.gmra.mrb[0].mxu0 %v303
        %v375 = vpop.f32.mrb[0].mxu0
        %v376 = vadd.f32 0.0, %v375
        %v377 = vpop.f32.mrb[0].mxu0
        %v378 = vpop.f32.mrb[0].mxu0
        %v379 = vadd.f32 0.0, %v378
        %v380 = vpop.f32.mrb[0].mxu0
        %381 = vmatprep.mubr.bf16.mxu0 0
        %382 = vmatmul.mubr.bf16.gmra.mrb[0].mxu0 %v306
        %v383 = vpop.f32.mrb[0].mxu0
        %v384 = vadd.f32 0.0, %v383
        %v385 = vpop.f32.mrb[0].mxu0
        %v386 = vpop.f32.mrb[0].mxu0
        %v387 = vadd.f32 0.0, %v386
        %v388 = vpop.f32.mrb[0].mxu0
        %389 = vmatprep.mubr.bf16.mxu0 0
        %390 = vmatmul.mubr.bf16.gmra.mrb[0].mxu0 %v309
        %v391 = vpop.f32.mrb[0].mxu0
        %v392 = vadd.f32 0.0, %v391
        %v393 = vpop.f32.mrb[0].mxu0
        %v394 = vpop.f32.mrb[0].mxu0
        %v395 = vadd.f32 0.0, %v394
        %v396 = vpop.f32.mrb[0].mxu0
        %397 = vmatprep.mubr.bf16.mxu0 0
        %398 = vmatmul.mubr.bf16.gmra.mrb[0].mxu0 %v312
        %v399 = vpop.f32.mrb[0].mxu0
        %v400 = vadd.f32 0.0, %v399
        %v401 = vpop.f32.mrb[0].mxu0
        %v402 = vpop.f32.mrb[0].mxu0
        %v403 = vadd.f32 0.0, %v402
        %v404 = vpop.f32.mrb[0].mxu0
        %405 = vmatprep.mubr.bf16.mxu0 0
        %406 = vmatmul.mubr.bf16.gmra.mrb[0].mxu0 %v315
        %v407 = vpop.f32.mrb[0].mxu0
        %v408 = vadd.f32 0.0, %v407
        %v409 = vpop.f32.mrb[0].mxu0
        %v410 = vpop.f32.mrb[0].mxu0
        %v411 = vadd.f32 0.0, %v410
        %v412 = vpop.f32.mrb[0].mxu0
        %413 = vdwg.mxu0
        %vm414 = vcmask 261120
        %v415 = vsel %vm414, %v352, 0.0
        %v416 = vsel %vm414, %v355, 0.0
        %v417 = vadd.f32 %v415, %v416
        %v418 = vsel %vm414, %v360, 0.0
        %v419 = vadd.f32 %v417, %v418
        %v420 = vsel %vm414, %v363, 0.0
        %v421 = vadd.f32 %v419, %v420
        %v422 = vsel %vm414, %v368, 0.0
        %v423 = vadd.f32 %v421, %v422
        %v424 = vsel %vm414, %v371, 0.0
        %v425 = vadd.f32 %v423, %v424
        %v426 = vsel %vm414, %v376, 0.0
        %v427 = vadd.f32 %v425, %v426
        %v428 = vsel %vm414, %v379, 0.0
        %v429 = vadd.f32 %v427, %v428
        %v430 = vsel %vm414, %v384, 0.0
        %v431 = vadd.f32 %v429, %v430
        %v432 = vsel %vm414, %v387, 0.0
        %v433 = vadd.f32 %v431, %v432
        %v434 = vsel %vm414, %v392, 0.0
        %v435 = vadd.f32 %v433, %v434
        %v436 = vsel %vm414, %v395, 0.0
        %v437 = vadd.f32 %v435, %v436
        %v438 = vsel %vm414, %v400, 0.0
        %v439 = vadd.f32 %v437, %v438
        %v440 = vsel %vm414, %v403, 0.0
        %v441 = vadd.f32 %v439, %v440
        %v442 = vsel %vm414, %v408, 0.0
        %v443 = vadd.f32 %v441, %v442
        %v444 = vsel %vm414, %v411, 0.0
        %v445 = vadd.f32 %v443, %v444
        %v446 = vrot.slane %v445, 4
        %v447 = vadd.f32 %v445, %v446
        %v448 = vrot.slane %v447, 2
        %v449 = vadd.f32 %v447, %v448
        %v450 = vrot.slane %v449, 1
        %v451 = vadd.f32 %v449, %v450
        %v452 = vmul.f32 %v352, %v352
        %v453 = vmul.f32 %v355, %v355
        %v454 = vmul.f32 %v360, %v360
        %v455 = vmul.f32 %v363, %v363
        %v456 = vmul.f32 %v368, %v368
        %v457 = vmul.f32 %v371, %v371
        %v458 = vmul.f32 %v376, %v376
        %v459 = vmul.f32 %v379, %v379
        %v460 = vmul.f32 %v384, %v384
        %v461 = vmul.f32 %v387, %v387
        %v462 = vmul.f32 %v392, %v392
        %v463 = vmul.f32 %v395, %v395
        %v464 = vmul.f32 %v400, %v400
        %v465 = vmul.f32 %v403, %v403
        %v466 = vmul.f32 %v408, %v408
        %v467 = vmul.f32 %v411, %v411
        %v468 = vsel %vm414, %v452, 0.0
        %v469 = vsel %vm414, %v453, 0.0
        %v470 = vadd.f32 %v468, %v469
        %v471 = vsel %vm414, %v454, 0.0
        %v472 = vadd.f32 %v470, %v471
        %v473 = vsel %vm414, %v455, 0.0
        %v474 = vadd.f32 %v472, %v473
        %v475 = vsel %vm414, %v456, 0.0
        %v476 = vadd.f32 %v474, %v475
        %v477 = vsel %vm414, %v457, 0.0
        %v478 = vadd.f32 %v476, %v477
        %v479 = vsel %vm414, %v458, 0.0
        %v480 = vadd.f32 %v478, %v479
        %v481 = vsel %vm414, %v459, 0.0
        %v482 = vadd.f32 %v480, %v481
        %v483 = vsel %vm414, %v460, 0.0
        %v484 = vadd.f32 %v482, %v483
        %v485 = vsel %vm414, %v461, 0.0
        %v486 = vadd.f32 %v484, %v485
        %v487 = vsel %vm414, %v462, 0.0
        %v488 = vadd.f32 %v486, %v487
        %v489 = vsel %vm414, %v463, 0.0
        %v490 = vadd.f32 %v488, %v489
        %v491 = vsel %vm414, %v464, 0.0
        %v492 = vadd.f32 %v490, %v491
        %v493 = vsel %vm414, %v465, 0.0
        %v494 = vadd.f32 %v492, %v493
        %v495 = vsel %vm414, %v466, 0.0
        %v496 = vadd.f32 %v494, %v495
        %v497 = vsel %vm414, %v467, 0.0
        %v498 = vadd.f32 %v496, %v497
        %v499 = vrot.slane %v498, 4
        %v500 = vadd.f32 %v498, %v499
        %v501 = vrot.slane %v500, 2
        %v502 = vadd.f32 %v500, %v501
        %v503 = vrot.slane %v502, 1
        %v504 = vadd.f32 %v502, %v503
        %vm505 = vcmask 1040384
        %v506 = vsel %vm505, %v451, %v504
        %vm507 = vcmask 254976
        %508 = vst.msk [vmem:[%s212] sm:$0x3] %vm507, %v506
        %vm509 = vcmask 326912
        %v510 = vsel %vm509, %v352, 0.0
        %v511 = vsel %vm509, %v355, 0.0
        %v512 = vadd.f32 %v510, %v511
        %v513 = vsel %vm509, %v360, 0.0
        %v514 = vadd.f32 %v512, %v513
        %v515 = vsel %vm509, %v363, 0.0
        %v516 = vadd.f32 %v514, %v515
        %v517 = vsel %vm509, %v368, 0.0
        %v518 = vadd.f32 %v516, %v517
        %v519 = vsel %vm509, %v371, 0.0
        %v520 = vadd.f32 %v518, %v519
        %v521 = vsel %vm509, %v376, 0.0
        %v522 = vadd.f32 %v520, %v521
        %v523 = vsel %vm509, %v379, 0.0
        %v524 = vadd.f32 %v522, %v523
        %v525 = vsel %vm509, %v384, 0.0
        %v526 = vadd.f32 %v524, %v525
        %v527 = vsel %vm509, %v387, 0.0
        %v528 = vadd.f32 %v526, %v527
        %v529 = vsel %vm509, %v392, 0.0
        %v530 = vadd.f32 %v528, %v529
        %v531 = vsel %vm509, %v395, 0.0
        %v532 = vadd.f32 %v530, %v531
        %v533 = vsel %vm509, %v400, 0.0
        %v534 = vadd.f32 %v532, %v533
        %v535 = vsel %vm509, %v403, 0.0
        %v536 = vadd.f32 %v534, %v535
        %v537 = vsel %vm509, %v408, 0.0
        %v538 = vadd.f32 %v536, %v537
        %v539 = vsel %vm509, %v411, 0.0
        %v540 = vadd.f32 %v538, %v539
        %v541 = vrot.slane %v540, 4
        %v542 = vadd.f32 %v540, %v541
        %v543 = vrot.slane %v542, 2
        %v544 = vadd.f32 %v542, %v543
        %v545 = vrot.slane %v544, 1
        %v546 = vadd.f32 %v544, %v545
        %v547 = vsel %vm509, %v452, 0.0
        %v548 = vsel %vm509, %v453, 0.0
        %v549 = vadd.f32 %v547, %v548
        %v550 = vsel %vm509, %v454, 0.0
        %v551 = vadd.f32 %v549, %v550
        %v552 = vsel %vm509, %v455, 0.0
        %v553 = vadd.f32 %v551, %v552
        %v554 = vsel %vm509, %v456, 0.0
        %v555 = vadd.f32 %v553, %v554
        %v556 = vsel %vm509, %v457, 0.0
        %v557 = vadd.f32 %v555, %v556
        %v558 = vsel %vm509, %v458, 0.0
        %v559 = vadd.f32 %v557, %v558
        %v560 = vsel %vm509, %v459, 0.0
        %v561 = vadd.f32 %v559, %v560
        %v562 = vsel %vm509, %v460, 0.0
        %v563 = vadd.f32 %v561, %v562
        %v564 = vsel %vm509, %v461, 0.0
        %v565 = vadd.f32 %v563, %v564
        %v566 = vsel %vm509, %v462, 0.0
        %v567 = vadd.f32 %v565, %v566
        %v568 = vsel %vm509, %v463, 0.0
        %v569 = vadd.f32 %v567, %v568
        %v570 = vsel %vm509, %v464, 0.0
        %v571 = vadd.f32 %v569, %v570
        %v572 = vsel %vm509, %v465, 0.0
        %v573 = vadd.f32 %v571, %v572
        %v574 = vsel %vm509, %v466, 0.0
        %v575 = vadd.f32 %v573, %v574
        %v576 = vsel %vm509, %v467, 0.0
        %v577 = vadd.f32 %v575, %v576
        %v578 = vrot.slane %v577, 4
        %v579 = vadd.f32 %v577, %v578
        %v580 = vrot.slane %v579, 2
        %v581 = vadd.f32 %v579, %v580
        %v582 = vrot.slane %v581, 1
        %v583 = vadd.f32 %v581, %v582
        %v584 = vsel %vm505, %v546, %v583
        %586 = vrot.lane.b32.xlu0 %v584, 96
        %v587 = vpop.permute.xlu0 %586
        %vm589 = vcmask 58368
        %590 = vst.msk [vmem:[%s205] sm:$0x3] %vm589, %v587
        %v591 = vpack.c.bf16 %v355, %v352
        %v592 = vpack.c.bf16 %v363, %v360
        %v593 = vpack.c.bf16 %v371, %v368
        %v594 = vpack.c.bf16 %v379, %v376
        %v595 = vpack.c.bf16 %v387, %v384
        %v596 = vpack.c.bf16 %v395, %v392
        %v597 = vpack.c.bf16 %v403, %v400
        %v598 = vpack.c.bf16 %v411, %v408
        %v607 = vunpack.c.l.b16 %v591
        %v608 = vunpack.c.h.b16 %v591
        %v609 = vunpack.c.l.b16 %v592
        %v610 = vunpack.c.h.b16 %v592
        %v611 = vunpack.c.l.b16 %v593
        %v612 = vunpack.c.h.b16 %v593
        %v613 = vunpack.c.l.b16 %v594
        %v614 = vunpack.c.h.b16 %v594
        %v615 = vunpack.c.l.b16 %v595
        %v616 = vunpack.c.h.b16 %v595
        %v617 = vunpack.c.l.b16 %v596
        %v618 = vunpack.c.h.b16 %v596
        %v619 = vunpack.c.l.b16 %v597
        %v620 = vunpack.c.h.b16 %v597
        %v621 = vunpack.c.l.b16 %v598
        %v622 = vunpack.c.h.b16 %v598
        %v623 = vpack.c.b16 %v607, %v607
        %v624 = vpack.c.b16 %v608, %v608
        %v625 = vpack.c.b16 %v609, %v609
        %v626 = vpack.c.b16 %v610, %v610
        %v627 = vpack.c.b16 %v611, %v611
        %v628 = vpack.c.b16 %v612, %v612
        %v629 = vpack.c.b16 %v613, %v613
        %v630 = vpack.c.b16 %v614, %v614
        %v631 = vpack.c.b16 %v615, %v615
        %v632 = vpack.c.b16 %v616, %v616
        %v633 = vpack.c.b16 %v617, %v617
        %v634 = vpack.c.b16 %v618, %v618
        %v635 = vpack.c.b16 %v619, %v619
        %v636 = vpack.c.b16 %v620, %v620
        %v637 = vpack.c.b16 %v621, %v621
        %v638 = vpack.c.b16 %v622, %v622
        %639 = vrot.lane.b32.xlu0 %v623, 96
        %v640 = vpop.permute.xlu0 %639
        %641 = vrot.lane.b32.xlu0 %v624, 96
        %v642 = vpop.permute.xlu0 %641
        %643 = vrot.lane.b32.xlu0 %v625, 96
        %v644 = vpop.permute.xlu0 %643
        %645 = vrot.lane.b32.xlu0 %v626, 96
        %v646 = vpop.permute.xlu0 %645
        %647 = vrot.lane.b32.xlu0 %v627, 96
        %v648 = vpop.permute.xlu0 %647
        %649 = vrot.lane.b32.xlu0 %v628, 96
        %v650 = vpop.permute.xlu0 %649
        %651 = vrot.lane.b32.xlu0 %v629, 96
        %v652 = vpop.permute.xlu0 %651
        %653 = vrot.lane.b32.xlu0 %v630, 96
        %v654 = vpop.permute.xlu0 %653
        %655 = vrot.lane.b32.xlu0 %v631, 96
        %v656 = vpop.permute.xlu0 %655
        %657 = vrot.lane.b32.xlu0 %v632, 96
        %v658 = vpop.permute.xlu0 %657
        %659 = vrot.lane.b32.xlu0 %v633, 96
        %v660 = vpop.permute.xlu0 %659
        %661 = vrot.lane.b32.xlu0 %v634, 96
        %v662 = vpop.permute.xlu0 %661
        %663 = vrot.lane.b32.xlu0 %v635, 96
        %v664 = vpop.permute.xlu0 %663
        %665 = vrot.lane.b32.xlu0 %v636, 96
        %v666 = vpop.permute.xlu0 %665
        %667 = vrot.lane.b32.xlu0 %v637, 96
        %v668 = vpop.permute.xlu0 %667
        %669 = vrot.lane.b32.xlu0 %v638, 96
        %v670 = vpop.permute.xlu0 %669
        %vm687 = vcmask 60416
        %688 = vst.msk [vmem:[%s225] sm:$0xf] %vm687, %v640
        %689 = vst.msk [vmem:[%s225 + $0x4] sm:$0xf] %vm687, %v642
        %690 = vst.msk [vmem:[%s225 + $0x8] sm:$0xf] %vm687, %v644
        %691 = vst.msk [vmem:[%s225 + $0xc] sm:$0xf] %vm687, %v646
        %692 = vst.msk [vmem:[%s225 + $0x10] sm:$0xf] %vm687, %v648
        %693 = vst.msk [vmem:[%s225 + $0x14] sm:$0xf] %vm687, %v650
        %694 = vst.msk [vmem:[%s225 + $0x18] sm:$0xf] %vm687, %v652
        %695 = vst.msk [vmem:[%s225 + $0x1c] sm:$0xf] %vm687, %v654
        %696 = vst.msk [vmem:[%s225 + $0x20] sm:$0xf] %vm687, %v656
        %697 = vst.msk [vmem:[%s225 + $0x24] sm:$0xf] %vm687, %v658
        %698 = vst.msk [vmem:[%s225 + $0x28] sm:$0xf] %vm687, %v660
        %699 = vst.msk [vmem:[%s225 + $0x2c] sm:$0xf] %vm687, %v662
        %700 = vst.msk [vmem:[%s225 + $0x30] sm:$0xf] %vm687, %v664
        %701 = vst.msk [vmem:[%s225 + $0x34] sm:$0xf] %vm687, %v666
        %702 = vst.msk [vmem:[%s225 + $0x38] sm:$0xf] %vm687, %v668
        %703 = vst.msk [vmem:[%s225 + $0x3c] sm:$0xf] %vm687, %v670
        %s704 = smul.u32 8, %s22
        %p705 = scmp.lt.s32.totalorder %s704, 31
        %s706 = scalar_select %p705, %s704, 31
        %s707 = smul.addr %s706, 2
        %s708 = smul.addr %s707, 4
        %s709 = scalar_lea.vmem %s2, %s708
        %s710 = sand.u32 %s103, 1
        %s711 = scalar_lea.sflag [#allocation3], %s710
        %s712 = sand.u32 %s103, 1
        %s713 = smul.addr %s712, 2
        %s714 = scalar_lea.vmem [#allocation2], %s713
        %s715 = sand.u32 %s129, 1
        %s716 = scalar_lea.sflag [#allocation5], %s715
        %s717 = sand.u32 %s129, 1
        %s718 = smul.addr %s717, 2
        %s719 = scalar_lea.vmem [#allocation4], %s718
        // Predicated region
        $region29: #{tpu_custom_call.1} parent=27 // pred_check
          %p720 = pneg %p87
        $region30: #{tpu_custom_call.1} parent=27 // pred_check_branch
          %722 = sbr.rel (%p720) target = $region32
        $region31: #{tpu_custom_call.1} parent=27 // pred_region
          %s723 = smul.u32 8, %s22
        $region32: #{tpu_custom_call.1} parent=27 // pred_fallthru
          _
        // Predicated region
        $region33: #{tpu_custom_call.1} parent=27 // pred_check
          %p724 = pneg %p113
        $region34: #{tpu_custom_call.1} parent=27 // pred_check_branch
          %726 = sbr.rel (%p724) target = $region36
        $region35: #{tpu_custom_call.1} parent=27 // pred_region
          %s728 = ssub.s32 32, 32
          %729 = vsyncadd %s711, %s728
          %s730 = smul.addr %s22, 32
          %s731 = scalar_lea.hbm %s3, %s730
          %s733 = sshll.u32 %s714, 4
          %s734 = int_to_ptr.vmem [resolvable:$true] %s733
          %736 = dma.vmem_to_hbm [thread:$0]  %s734, 32, %s731, %s711
        $region36: #{tpu_custom_call.1} parent=27 // pred_fallthru
          _
        // Predicated region
        $region37: #{tpu_custom_call.1} parent=27 // pred_check
          %p737 = pneg %p139
        $region38: #{tpu_custom_call.1} parent=27 // pred_check_branch
          %739 = sbr.rel (%p737) target = $region40
        $region39: #{tpu_custom_call.1} parent=27 // pred_region
          %s741 = ssub.s32 32, 32
          %742 = vsyncadd %s716, %s741
          %s743 = smul.addr %s22, 32
          %s744 = scalar_lea.hbm %s4, %s743
          %s746 = sshll.u32 %s719, 4
          %s747 = int_to_ptr.vmem [resolvable:$true] %s746
          %749 = dma.vmem_to_hbm [thread:$0]  %s747, 32, %s744, %s716
        $region40: #{tpu_custom_call.1} parent=27 // pred_fallthru
          _
      $region28: #{tpu_custom_call.1} parent=5 // pred_fallthru
        _
      %p750 = scmp.le.s32.totalorder 2, %s17
      // Predicated region
      $region41: #{tpu_custom_call.1} parent=5 // pred_check
        %p751 = pneg %p750
      $region42: #{tpu_custom_call.1} parent=5 // pred_check_branch
        %753 = sbr.rel (%p751) target = $region44
      $region43: #{tpu_custom_call.1} parent=5 // pred_region
        %s754 = ssub.s32 %s17, 2
        // Predicated region
        $region45: #{tpu_custom_call.1} parent=43 // pred_check
          %p755 = pneg %p93
        $region46: #{tpu_custom_call.1} parent=43 // pred_check_branch
          %757 = sbr.rel (%p755) target = $region48
        $region47: #{tpu_custom_call.1} parent=43 // pred_region
          %s758 = smul.u32 8, %s23
          %p759 = scmp.lt.s32.totalorder %s758, 31
          %s760 = scalar_select %p759, %s758, 31
          %s761 = smul.addr %s760, 2
          %s762 = smul.addr %s761, 4
          %s763 = scalar_lea.vmem %s2, %s762
        $region48: #{tpu_custom_call.1} parent=43 // pred_fallthru
          _
        // Predicated region
        $region49: #{tpu_custom_call.1} parent=43 // pred_check
          %p764 = pneg %p119
        $region50: #{tpu_custom_call.1} parent=43 // pred_check_branch
          %766 = sbr.rel (%p764) target = $region52
        $region51: #{tpu_custom_call.1} parent=43 // pred_region
          %s767 = sand.u32 %s104, 1
          %s768 = scalar_lea.sflag [#allocation3], %s767
          %s769 = sand.u32 %s104, 1
          %s770 = smul.addr %s769, 2
          %s771 = scalar_lea.vmem [#allocation2], %s770
          %772 = dma.done %s768, 32
        $region52: #{tpu_custom_call.1} parent=43 // pred_fallthru
          _
        // Predicated region
        $region53: #{tpu_custom_call.1} parent=43 // pred_check
          %p773 = pneg %p145
        $region54: #{tpu_custom_call.1} parent=43 // pred_check_branch
          %775 = sbr.rel (%p773) target = $region56
        $region55: #{tpu_custom_call.1} parent=43 // pred_region
          %s776 = sand.u32 %s130, 1
          %s777 = scalar_lea.sflag [#allocation5], %s776
          %s778 = sand.u32 %s130, 1
          %s779 = smul.addr %s778, 2
          %s780 = scalar_lea.vmem [#allocation4], %s779
          %781 = dma.done %s777, 32
        $region56: #{tpu_custom_call.1} parent=43 // pred_fallthru
          _
      $region44: #{tpu_custom_call.1} parent=5 // pred_fallthru
        _
    $region6: #{tpu_custom_call.1} parent=1 // loop_footer
      %s21 = sadd.s32 1, %s17
    $region7: #{tpu_custom_call.1} parent=1 // loop_footer_branch
      %16 = sbr.rel target = $region3
    $region8: #{tpu_custom_call.1} parent=1 // loop_exit
      _
    %782 = vsyncpa [#allocation3], 1
    %s783 = scalar_lea.sflag [#allocation3], 1
    %784 = vsyncpa %s783, 1
    %785 = vsyncpa [#allocation5], 1
    %s786 = scalar_lea.sflag [#allocation5], 1
    %787 = vsyncpa %s786, 1

</llo_original>
